<compile_context>
chip_gen: v5e
topology: v5e:2x2
jax: 0.10.0
libtpu: 0.0.40
codegen_flags: <defaults>
</compile_context>

<pallas_src>
import jax
import jax.numpy as jnp
from jax.experimental import pallas as pl
from jax.experimental.pallas import tpu as pltpu


def _round_up(x, m):
    return (x + m - 1) // m * m


def _stats_kernel(p_ref, w_ref, sum_ref, ssq_ref):
    """Pass 1: per-channel sum / sum-of-squares of y = P_tile @ W."""
    @pl.when(pl.program_id(0) == 0)
    def _init():
        sum_ref[...] = jnp.zeros_like(sum_ref)
        ssq_ref[...] = jnp.zeros_like(ssq_ref)

    y = jnp.dot(p_ref[...], w_ref[...], preferred_element_type=jnp.float32)
    sum_ref[...] += jnp.sum(y, axis=0, keepdims=True)
    ssq_ref[...] += jnp.sum(y * y, axis=0, keepdims=True)


def _norm_relu_kernel(p_ref, w_ref, scale_ref, shift_ref, o_ref):
    """Pass 2: y = P_tile @ W, out = relu(y * scale + shift)."""
    y = jnp.dot(p_ref[...], w_ref[...], preferred_element_type=jnp.float32)
    o_ref[...] = jnp.maximum(y * scale_ref[...] + shift_ref[...], 0.0).astype(
        o_ref.dtype)


def conv_forward(x, w, b, gamma, beta, *, tile_m=1024, eps=1e-5):
    """x: [N, Cin, H, W] f32 -> [N, 64, Ho, Wo] f32 (Conv -> BN(train) -> ReLU)."""
    del b  # bias is exactly cancelled by the BatchNorm mean subtraction
    N, C, H, W = x.shape
    KH = KW = 7
    S = 2
    P = 3
    Ho = (H + 2 * P - KH) // S + 1
    Wo = (W + 2 * P - KW) // S + 1
    Cout = w.shape[0]

    # ---- im2col (glue, plain JAX); feature order (kh, kw, cin) --------------
    xp = jnp.pad(x, ((0, 0), (0, 0), (P, P), (P, P))).transpose(0, 2, 3, 1)  # NHWC
    cols = [xp[:, kh::S, kw::S, :][:, :Ho, :Wo, :]
            for kh in range(KH) for kw in range(KW)]
    patches = jnp.concatenate(cols, axis=-1)          # [N, Ho, Wo, KH*KW*C]
    M = N * Ho * Wo
    K = C * KH * KW
    patches = patches.reshape(M, K)

    # ---- lane / sublane padding + bf16 MXU operands -------------------------
    K_pad = _round_up(K, 128)
    Cout_pad = _round_up(Cout, 128)
    tile_m = min(tile_m, _round_up(M, 8))
    M_pad = _round_up(M, tile_m)

    patches_p = jnp.pad(
        patches, ((0, M_pad - M), (0, K_pad - K))).astype(jnp.bfloat16)
    # OIHW weights -> (kh, kw, cin) x cout, matching the patch feature order.
    wmat = jnp.transpose(w, (2, 3, 1, 0)).reshape(K, Cout)
    wmat_p = jnp.pad(
        wmat, ((0, K_pad - K), (0, Cout_pad - Cout))).astype(jnp.bfloat16)

    grid = (M_pad // tile_m,)
    p_spec = pl.BlockSpec((tile_m, K_pad), lambda i: (i, 0))
    w_spec = pl.BlockSpec((K_pad, Cout_pad), lambda i: (0, 0))
    vec_spec = pl.BlockSpec((1, Cout_pad), lambda i: (0, 0))

    # ---- pass 1: accumulate per-channel sum / sum-of-squares over all rows --
    ch_sum, ch_ssq = pl.pallas_call(
        _stats_kernel,
        out_shape=(jax.ShapeDtypeStruct((1, Cout_pad), jnp.float32),
                   jax.ShapeDtypeStruct((1, Cout_pad), jnp.float32)),
        grid=grid,
        in_specs=[p_spec, w_spec],
        out_specs=(vec_spec, vec_spec),
        compiler_params=pltpu.CompilerParams(
            dimension_semantics=("arbitrary",)),
    )(patches_p, wmat_p)

    # ---- tiny wrapper math: train-mode BN (biased var) -> scale & shift -----
    inv_m = 1.0 / float(M)           # zero-padded rows contribute exactly 0
    mean = ch_sum * inv_m
    var = jnp.maximum(ch_ssq * inv_m - mean * mean, 0.0)
    gamma_p = jnp.pad(gamma.astype(jnp.float32),
                      (0, Cout_pad - Cout)).reshape(1, Cout_pad)
    beta_p = jnp.pad(beta.astype(jnp.float32),
                     (0, Cout_pad - Cout)).reshape(1, Cout_pad)
    scale = gamma_p * jax.lax.rsqrt(var + eps)
    shift = beta_p - mean * scale

    # ---- pass 2: normalize + ReLU (lane-dense 128-wide stores) --------------
    out2d = pl.pallas_call(
        _norm_relu_kernel,
        out_shape=jax.ShapeDtypeStruct((M_pad, Cout_pad), jnp.float32),
        grid=grid,
        in_specs=[p_spec, w_spec, vec_spec, vec_spec],
        out_specs=pl.BlockSpec((tile_m, Cout_pad), lambda i: (i, 0)),
        compiler_params=pltpu.CompilerParams(
            dimension_semantics=("parallel",)),
    )(patches_p, wmat_p, scale, shift)

    # [M, Cout] -> NCHW (module returns NCHW; keep semantics)
    return out2d[:M, :Cout].reshape(N, Ho, Wo, Cout).transpose(0, 3, 1, 2)


def _reference(x, w, b, gamma, beta, eps=1e-5):
    """Pure-JAX forward of the module (f32) for correctness checking."""
    y = jax.lax.conv_general_dilated(
        x, w, window_strides=(2, 2), padding=((3, 3), (3, 3)),
        dimension_numbers=("NCHW", "OIHW", "NCHW"),
        precision=jax.lax.Precision.HIGHEST)
    y = y + b.reshape(1, -1, 1, 1)
    mean = jnp.mean(y, axis=(0, 2, 3), keepdims=True)
    var = jnp.mean(jnp.square(y - mean), axis=(0, 2, 3), keepdims=True)
    yh = (y - mean) * jax.lax.rsqrt(var + eps)
    return jnp.maximum(
        gamma.reshape(1, -1, 1, 1) * yh + beta.reshape(1, -1, 1, 1), 0.0)


if __name__ == "__main__":
    key = jax.random.PRNGKey(0)
    k_x, k_w, k_b, k_g, k_beta = jax.random.split(key, 5)

    N, Cin, H, W = 2, 1, 16, 16      # module default in_dim=1
    Cout = 64

    x = jax.random.normal(k_x, (N, Cin, H, W), dtype=jnp.float32)
    w = jax.random.normal(k_w, (Cout, Cin, 7, 7), dtype=jnp.float32) * 0.1
    b = jax.random.normal(k_b, (Cout,), dtype=jnp.float32) * 0.1
    gamma = 1.0 + 0.1 * jax.random.normal(k_g, (Cout,), dtype=jnp.float32)
    beta = 0.1 * jax.random.normal(k_beta, (Cout,), dtype=jnp.float32)

    # tile_m=64 keeps this toy problem multi-tile so the cross-tile BatchNorm
    # accumulation path is exercised (production default tile is 1024 rows).
    out = conv_forward(x, w, b, gamma, beta, tile_m=64)
    out = jax.block_until_ready(out)
    assert out.shape == (N, Cout, 8, 8), out.shape

    # Tight check against a reference using the same bf16-quantized MXU
    # operands (both sides accumulate the conv in f32).
    x_q = x.astype(jnp.bfloat16).astype(jnp.float32)
    w_q = w.astype(jnp.bfloat16).astype(jnp.float32)
    ref_q = _reference(x_q, w_q, b, gamma, beta)
    assert jnp.allclose(out, ref_q, atol=3e-3, rtol=3e-3), float(
        jnp.max(jnp.abs(out - ref_q)))

    # Loose sanity check against full-f32 module semantics (bf16 operand
    # rounding is the only source of difference).
    ref = _reference(x, w, b, gamma, beta)
    assert jnp.allclose(out, ref, atol=1e-1, rtol=1e-1), float(
        jnp.max(jnp.abs(out - ref)))

    print("KERNEL_OK")
</pallas_src>

<mosaic_0001>
module attributes {stable_mosaic.version = 11 : i64} {
  func.func @_stats_kernel(%arg0: i32, %arg1: memref<64x128xbf16, #tpu.memory_space<vmem>>, %arg2: memref<128x128xbf16, #tpu.memory_space<vmem>>, %arg3: memref<1x128xf32, #tpu.memory_space<vmem>>, %arg4: memref<1x128xf32, #tpu.memory_space<vmem>>) attributes {dimension_semantics = [#tpu.dimension_semantics<arbitrary>], iteration_bounds = array<i64: 2>, scalar_prefetch = 0 : i64, scratch_operands = 0 : i64, tpu.core_type = #tpu.core_type<tc>, window_params = [{transform_indices = @transform_0, window_bounds = array<i64: 64, 128>}, {pipeline_mode = #tpu.pipeline_mode<synchronous>, transform_indices = @transform_1, window_bounds = array<i64: 128, 128>}, {pipeline_mode = #tpu.pipeline_mode<synchronous>, transform_indices = @transform_2, window_bounds = array<i64: 1, 128>}, {pipeline_mode = #tpu.pipeline_mode<synchronous>, transform_indices = @transform_3, window_bounds = array<i64: 1, 128>}]} {
    %c0_i32 = arith.constant 0 : i32
    %0 = arith.cmpi eq, %arg0, %c0_i32 : i32
    %1 = arith.extui %0 : i1 to i32
    %c0_i32_0 = arith.constant 0 : i32
    %2 = arith.cmpi ne, %1, %c0_i32_0 : i32
    scf.if %2 {
      %cst_14 = arith.constant 0.000000e+00 : f32
      %17 = vector.broadcast %cst_14 : f32 to vector<1x128xf32>
      %c0_15 = arith.constant 0 : index
      %c0_16 = arith.constant 0 : index
      %18 = vector.load %arg3[%c0_15, %c0_16] : memref<1x128xf32, #tpu.memory_space<vmem>>, vector<1x128xf32>
      tpu.vector_store %arg3[%c0_15, %c0_16], %17 {strides = array<i32>} : memref<1x128xf32, #tpu.memory_space<vmem>>, vector<1x128xf32>,
      %cst_17 = arith.constant 0.000000e+00 : f32
      %19 = vector.broadcast %cst_17 : f32 to vector<1x128xf32>
      %c0_18 = arith.constant 0 : index
      %c0_19 = arith.constant 0 : index
      %20 = vector.load %arg4[%c0_18, %c0_19] : memref<1x128xf32, #tpu.memory_space<vmem>>, vector<1x128xf32>
      tpu.vector_store %arg4[%c0_18, %c0_19], %19 {strides = array<i32>} : memref<1x128xf32, #tpu.memory_space<vmem>>, vector<1x128xf32>,
    } else {
    }
    %c0 = arith.constant 0 : index
    %c0_1 = arith.constant 0 : index
    %3 = vector.load %arg1[%c0, %c0_1] : memref<64x128xbf16, #tpu.memory_space<vmem>>, vector<64x128xbf16>
    %c0_2 = arith.constant 0 : index
    %c0_3 = arith.constant 0 : index
    %4 = vector.load %arg2[%c0_2, %c0_3] : memref<128x128xbf16, #tpu.memory_space<vmem>>, vector<128x128xbf16>
    %cst = arith.constant dense<0.000000e+00> : vector<64x128xf32>
    %5 = tpu.matmul %3, %4, %cst {dimension_numbers = #tpu.dot_dimension_numbers<[1], [0], [0], [1], [0, 0, 1, 1], [], []>} : vector<64x128xbf16>, vector<128x128xbf16>, vector<64x128xf32> -> vector<64x128xf32>
    %c0_4 = arith.constant 0 : index
    %c0_5 = arith.constant 0 : index
    %6 = vector.load %arg3[%c0_4, %c0_5] : memref<1x128xf32, #tpu.memory_space<vmem>>, vector<1x128xf32>
    %cst_6 = arith.constant dense<0.000000e+00> : vector<128xf32>
    %7 = vector.multi_reduction <add>, %5, %cst_6 [0] : vector<64x128xf32> to vector<128xf32>
    %8 = vector.shape_cast %7 : vector<128xf32> to vector<1x128xf32>
    %9 = arith.addf %6, %8 : vector<1x128xf32>
    %c0_7 = arith.constant 0 : index
    %c0_8 = arith.constant 0 : index
    %10 = vector.load %arg3[%c0_7, %c0_8] : memref<1x128xf32, #tpu.memory_space<vmem>>, vector<1x128xf32>
    tpu.vector_store %arg3[%c0_7, %c0_8], %9 {strides = array<i32>} : memref<1x128xf32, #tpu.memory_space<vmem>>, vector<1x128xf32>,
    %c0_9 = arith.constant 0 : index
    %c0_10 = arith.constant 0 : index
    %11 = vector.load %arg4[%c0_9, %c0_10] : memref<1x128xf32, #tpu.memory_space<vmem>>, vector<1x128xf32>
    %12 = arith.mulf %5, %5 : vector<64x128xf32>
    %cst_11 = arith.constant dense<0.000000e+00> : vector<128xf32>
    %13 = vector.multi_reduction <add>, %12, %cst_11 [0] : vector<64x128xf32> to vector<128xf32>
    %14 = vector.shape_cast %13 : vector<128xf32> to vector<1x128xf32>
    %15 = arith.addf %11, %14 : vector<1x128xf32>
    %c0_12 = arith.constant 0 : index
    %c0_13 = arith.constant 0 : index
    %16 = vector.load %arg4[%c0_12, %c0_13] : memref<1x128xf32, #tpu.memory_space<vmem>>, vector<1x128xf32>
    tpu.vector_store %arg4[%c0_12, %c0_13], %15 {strides = array<i32>} : memref<1x128xf32, #tpu.memory_space<vmem>>, vector<1x128xf32>,
    return
  }
  func.func @transform_0(%arg0: i32) -> (i32, i32) {
    %c0_i32 = arith.constant 0 : i32
    %c0_i32_0 = arith.constant 0 : i32
    return %arg0, %c0_i32 : i32, i32
  }
  func.func @transform_1(%arg0: i32) -> (i32, i32) {
    %c0_i32 = arith.constant 0 : i32
    %c0_i32_0 = arith.constant 0 : i32
    %c0_i32_1 = arith.constant 0 : i32
    return %c0_i32, %c0_i32_0 : i32, i32
  }
  func.func @transform_2(%arg0: i32) -> (i32, i32) {
    %c0_i32 = arith.constant 0 : i32
    %c0_i32_0 = arith.constant 0 : i32
    %c0_i32_1 = arith.constant 0 : i32
    return %c0_i32, %c0_i32_0 : i32, i32
  }
  func.func @transform_3(%arg0: i32) -> (i32, i32) {
    %c0_i32 = arith.constant 0 : i32
    %c0_i32_0 = arith.constant 0 : i32
    %c0_i32_1 = arith.constant 0 : i32
    return %c0_i32, %c0_i32_0 : i32, i32
  }
}

</mosaic_0001>

<llo_original>
// kernel: tpu_custom_call.1
$region0: #{tpu_custom_call.1}
  #allocation0 [shape = 'u32[]', space=smem, size = 0x4, offset = 0x4, fixed_abs, tag = 'smem constant byte address 0x4 - core index']
  #allocation1 [shape = 'u32[72,128]{1,0:T(1,128)}', space=vmem, size = 0x9000, scoped, tag = 'internal scratch']
  %s0 = inlined_call_operand.hbm [shape: bf16[128,128], index: 0, kind: input, shape index: {}]
  %s1 = inlined_call_operand.hbm [shape: bf16[128,128], index: 1, kind: input, shape index: {}]
  %s2 = inlined_call_operand.hbm [shape: f32[1,128], index: 2, kind: output, shape index: {0}]
  %s3 = inlined_call_operand.hbm [shape: f32[1,128], index: 3, kind: output, shape index: {1}]
  %4 = xla_tuple %s2, %s3
  %s5 = sld [smem:[#allocation0]]
  $region61: #{tpu_custom_call.1} parent=0
    _
  %s7 = ssub.s32 1, %s5
  %s8 = scalar_select 0, %s7, %s5
  $region1: #{tpu_custom_call.1} parent=0
    #allocation2 [shape = 'u8[32768]{0}', space=vmem, size = 0x8000, scoped, tag = 'input window, operand 0']
    #allocation3 [shape = 's32[2]{0}', space=sflag, size = 0x8, scoped, tag = 'scoped memory for tpu_custom_call.1']
    #allocation4 [shape = 's32[2]{0}', space=sflag, size = 0x8, scoped, tag = 'scoped memory for tpu_custom_call.1']
    #allocation5 [shape = 'u8[32768]{0}', space=vmem, size = 0x8000, scoped, tag = 'input window, operand 1, single buffered']
    #allocation6 [shape = 's32[1]{0}', space=sflag, size = 0x4, scoped, tag = 'scoped memory for tpu_custom_call.1']
    #allocation7 [shape = 'u8[512]{0}', space=vmem, size = 0x400, scoped, tag = 'output window, operand 0, single buffered']
    #allocation8 [shape = 'u8[512]{0}', space=vmem, size = 0x400, scoped, tag = 'output window, operand 1, single buffered']
    #allocation9 [shape = 's32[1]{0}', space=sflag, size = 0x4, scoped, tag = 'scoped memory for tpu_custom_call.1']
    %9 = vsyncpa [#allocation3], 0
    %s10 = scalar_lea.sflag [#allocation3], 1
    %11 = vsyncpa %s10, 0
    %12 = vsyncpa [#allocation6], 0
    %13 = vsyncpa [#allocation4], 0
    %14 = vsyncpa [#allocation9], 0
    loop: start=0, step=1, limit=4
    $region2: #{tpu_custom_call.1} parent=1 // loop_pre_header
      _
    $region3: #{tpu_custom_call.1} parent=1 // loop_header
      %s16 = sphi 0, %s20
      %p17 = scmp.ge.s32.totalorder %s16, 4
      %s26 = sphi 0, %s28
      %s29 = sphi 0, %s26
      %s30 = sphi 0, %s29
      %s46 = sphi 0, %s30
      %s50 = sphi 0, %s50
      %s52 = sphi 0, %s50
      %s53 = sphi 0, %s52
      %s67 = sphi 0, %s53
      %s71 = sphi 0, %s71
      %s73 = sphi 0, %s71
      %s74 = sphi 0, %s73
      %s88 = sphi 0, %s74
      %s92 = sphi 0, %s92
      %s94 = sphi 0, %s92
      %s95 = sphi 0, %s94
      %s109 = sphi 0, %s95
    $region4: #{tpu_custom_call.1} parent=1 // loop_header_branch
      %19 = sbr.rel (%p17) target = $region8
    $region5: #{tpu_custom_call.1} parent=1 // loop_body
      %s21 = ssub.s32 %s16, 1
      %s22 = ssub.s32 %s16, 2
      %s23 = sadd.s32 %s16, 1
      %s24 = ssub.s32 %s16, %s23
      %p25 = scmp.eq.s32.totalorder %s24, 0
      %s27 = sadd.s32 %s26, 1
      %s28 = scalar_select %p25, %s26, %s27
      %p31 = pneg %p25
      %p32 = scmp.eq.s32.totalorder %s16, 1
      %p33 = por %p31, %p32
      %p34 = scmp.ne.s32.totalorder %s26, %s29
      %p35 = scmp.eq.s32.totalorder %s16, 0
      %p36 = por %p34, %p35
      %p37 = scmp.ne.s32.totalorder %s26, %s29
      %p38 = scmp.eq.s32.totalorder %s21, 1
      %p39 = por %p37, %p38
      %p40 = scmp.ne.s32.totalorder %s29, %s30
      %p41 = scmp.eq.s32.totalorder %s21, 0
      %p42 = por %p40, %p41
      %p43 = scmp.ne.s32.totalorder %s29, %s30
      %p44 = scmp.eq.s32.totalorder %s22, 1
      %p45 = por %p43, %p44
      %p47 = scmp.ne.s32.totalorder %s30, %s46
      %p48 = scmp.eq.s32.totalorder %s22, 0
      %p49 = por %p47, %p48
      %s51 = sadd.s32 %s50, 1
      %p54 = scmp.eq.s32.totalorder %s16, 1
      %p55 = scmp.ne.s32.totalorder %s50, %s52
      %p56 = scmp.eq.s32.totalorder %s16, 0
      %p57 = por %p55, %p56
      %p58 = scmp.ne.s32.totalorder %s50, %s52
      %p59 = scmp.eq.s32.totalorder %s21, 1
      %p60 = por %p58, %p59
      %p61 = scmp.ne.s32.totalorder %s52, %s53
      %p62 = scmp.eq.s32.totalorder %s21, 0
      %p63 = por %p61, %p62
      %p64 = scmp.ne.s32.totalorder %s52, %s53
      %p65 = scmp.eq.s32.totalorder %s22, 1
      %p66 = por %p64, %p65
      %p68 = scmp.ne.s32.totalorder %s53, %s67
      %p69 = scmp.eq.s32.totalorder %s22, 0
      %p70 = por %p68, %p69
      %s72 = sadd.s32 %s71, 1
      %p75 = scmp.eq.s32.totalorder %s16, 1
      %p76 = scmp.ne.s32.totalorder %s71, %s73
      %p77 = scmp.eq.s32.totalorder %s16, 0
      %p78 = por %p76, %p77
      %p79 = scmp.ne.s32.totalorder %s71, %s73
      %p80 = scmp.eq.s32.totalorder %s21, 1
      %p81 = por %p79, %p80
      %p82 = scmp.ne.s32.totalorder %s73, %s74
      %p83 = scmp.eq.s32.totalorder %s21, 0
      %p84 = por %p82, %p83
      %p85 = scmp.ne.s32.totalorder %s73, %s74
      %p86 = scmp.eq.s32.totalorder %s22, 1
      %p87 = por %p85, %p86
      %p89 = scmp.ne.s32.totalorder %s74, %s88
      %p90 = scmp.eq.s32.totalorder %s22, 0
      %p91 = por %p89, %p90
      %s93 = sadd.s32 %s92, 1
      %p96 = scmp.eq.s32.totalorder %s16, 1
      %p97 = scmp.ne.s32.totalorder %s92, %s94
      %p98 = scmp.eq.s32.totalorder %s16, 0
      %p99 = por %p97, %p98
      %p100 = scmp.ne.s32.totalorder %s92, %s94
      %p101 = scmp.eq.s32.totalorder %s21, 1
      %p102 = por %p100, %p101
      %p103 = scmp.ne.s32.totalorder %s94, %s95
      %p104 = scmp.eq.s32.totalorder %s21, 0
      %p105 = por %p103, %p104
      %p106 = scmp.ne.s32.totalorder %s94, %s95
      %p107 = scmp.eq.s32.totalorder %s22, 1
      %p108 = por %p106, %p107
      %p110 = scmp.ne.s32.totalorder %s95, %s109
      %p111 = scmp.eq.s32.totalorder %s22, 0
      %p112 = por %p110, %p111
      %p113 = scmp.le.s32.totalorder 1, %s16
      %p114 = scmp.lt.s32.totalorder %s16, 3
      %p115 = pnand %p113, %p114
      %p116 = pneg %p115
      // Predicated region
      $region9: #{tpu_custom_call.1} parent=5 // pred_check
        _
      $region10: #{tpu_custom_call.1} parent=5 // pred_check_branch
        %118 = sbr.rel (%p115) target = $region12
      $region11: #{tpu_custom_call.1} parent=5 // pred_region
        %s119 = ssub.s32 %s16, 1
        // Predicated region
        $region13: #{tpu_custom_call.1} parent=11 // pred_check
          %p120 = pneg %p63
        $region14: #{tpu_custom_call.1} parent=11 // pred_check_branch
          %122 = sbr.rel (%p120) target = $region16
        $region15: #{tpu_custom_call.1} parent=11 // pred_region
          %124 = vsyncadd [#allocation6], 0
          %s125 = sshll.u32 %s1, 4
          %s126 = int_to_ptr.hbm [resolvable:$true] %s125
          %s127 = sshll.u32 [#allocation5], 4
          %s128 = int_to_ptr.vmem [resolvable:$true] %s127
          %133 = dma.hbm_to_vmem [thread:$0]  %s126, 1024, %s128, [#allocation6], 64, 64, 4
        $region16: #{tpu_custom_call.1} parent=11 // pred_fallthru
          _
      $region12: #{tpu_custom_call.1} parent=5 // pred_fallthru
        _
      %p134 = scmp.lt.s32.totalorder %s16, 2
      // Predicated region
      $region17: #{tpu_custom_call.1} parent=5 // pred_check
        %p135 = pneg %p134
      $region18: #{tpu_custom_call.1} parent=5 // pred_check_branch
        %137 = sbr.rel (%p135) target = $region20
      $region19: #{tpu_custom_call.1} parent=5 // pred_region
        // Predicated region
        $region21: #{tpu_custom_call.1} parent=19 // pred_check
          %p138 = pneg %p36
        $region22: #{tpu_custom_call.1} parent=19 // pred_check_branch
          %140 = sbr.rel (%p138) target = $region24
        $region23: #{tpu_custom_call.1} parent=19 // pred_region
          %s141 = sand.u32 %s26, 1
          %s142 = scalar_lea.sflag [#allocation3], %s141
          %s143 = sand.u32 %s26, 1
          %s144 = smul.addr %s143, 32
          %s145 = scalar_lea.vmem [#allocation2], %s144
          %s146 = smul.u32 8, %s16
          %148 = vsyncadd %s142, 0
          %s149 = smul.addr %s146, 4
          %s150 = scalar_lea.hbm %s0, %s149
          %s151 = sshll.u32 %s150, 4
          %s152 = int_to_ptr.hbm [resolvable:$true] %s151
          %s153 = sshll.u32 %s145, 4
          %s154 = int_to_ptr.vmem [resolvable:$true] %s153
          %159 = dma.hbm_to_vmem [thread:$0]  %s152, 512, %s154, %s142, 64, 64, 4
        $region24: #{tpu_custom_call.1} parent=19 // pred_fallthru
          _
      $region20: #{tpu_custom_call.1} parent=5 // pred_fallthru
        _
      %p160 = scmp.le.s32.totalorder 1, %s16
      %p161 = scmp.lt.s32.totalorder %s16, 3
      %p162 = pnand %p160, %p161
      %p163 = pneg %p162
      // Predicated region
      $region25: #{tpu_custom_call.1} parent=5 // pred_check
        _
      $region26: #{tpu_custom_call.1} parent=5 // pred_check_branch
        %165 = sbr.rel (%p162) target = $region28
      $region27: #{tpu_custom_call.1} parent=5 // pred_region
        %s166 = ssub.s32 %s16, 1
        %s167 = sand.u32 %s29, 1
        %s168 = scalar_lea.sflag [#allocation3], %s167
        %s169 = sand.u32 %s29, 1
        %s170 = smul.addr %s169, 32
        %s171 = scalar_lea.vmem [#allocation2], %s170
        // Predicated region
        $region29: #{tpu_custom_call.1} parent=27 // pred_check
          %p172 = pneg %p42
        $region30: #{tpu_custom_call.1} parent=27 // pred_check_branch
          %174 = sbr.rel (%p172) target = $region32
        $region31: #{tpu_custom_call.1} parent=27 // pred_region
          %176 = dma.done %s168, 512
        $region32: #{tpu_custom_call.1} parent=27 // pred_fallthru
          _
        // Predicated region
        $region33: #{tpu_custom_call.1} parent=27 // pred_check
          %p177 = pneg %p63
        $region34: #{tpu_custom_call.1} parent=27 // pred_check_branch
          %179 = sbr.rel (%p177) target = $region36
        $region35: #{tpu_custom_call.1} parent=27 // pred_region
          %181 = dma.done [#allocation6], 1024
        $region36: #{tpu_custom_call.1} parent=27 // pred_fallthru
          _
        %s182 = sand.u32 %s29, 1
        %s183 = scalar_lea.sflag [#allocation3], %s182
        %s184 = sand.u32 %s29, 1
        %s185 = smul.addr %s184, 32
        %s186 = scalar_lea.vmem [#allocation2], %s185
        %p187 = pneg %p42
        %p188 = pneg %p39
        %p189 = pneg %p63
        %p190 = pneg %p60
        %p191 = pneg %p84
        %p192 = pneg %p81
        %p193 = pneg %p105
        %p194 = pneg %p102
        %s195 = smul.u32 8, %s21
        %p196 = scmp.eq.s32.totalorder %s21, 0
        // Predicated region
        $region37: #{tpu_custom_call.1} parent=27 // pred_check
          %p197 = pneg %p196
        $region38: #{tpu_custom_call.1} parent=27 // pred_check_branch
          %199 = sbr.rel (%p197) target = $region40
        $region39: #{tpu_custom_call.1} parent=27 // pred_region
          %200 = vst [vmem:[#allocation7] sm:$0x1] 0.0
          %201 = vst [vmem:[#allocation8] sm:$0x1] 0.0
        $region40: #{tpu_custom_call.1} parent=27 // pred_fallthru
          _
        %v202 = vld [vmem:[%s171] sm:$0xf]
        %v203 = vld [vmem:[%s171 + $0x4] sm:$0xf]
        %v204 = vld [vmem:[%s171 + $0x8] sm:$0xf]
        %v205 = vld [vmem:[%s171 + $0xc] sm:$0xf]
        %v206 = vld [vmem:[%s171 + $0x10] sm:$0xf]
        %v207 = vld [vmem:[%s171 + $0x14] sm:$0xf]
        %v208 = vld [vmem:[%s171 + $0x18] sm:$0xf]
        %v209 = vld [vmem:[%s171 + $0x1c] sm:$0xf]
        %v210 = vld [vmem:[#allocation5] sm:$0xf]
        %v211 = vld [vmem:[#allocation5 + $0x4] sm:$0xf]
        %v212 = vld [vmem:[#allocation5 + $0x8] sm:$0xf]
        %v213 = vld [vmem:[#allocation5 + $0xc] sm:$0xf]
        %v214 = vld [vmem:[#allocation5 + $0x10] sm:$0xf]
        %v215 = vld [vmem:[#allocation5 + $0x14] sm:$0xf]
        %v216 = vld [vmem:[#allocation5 + $0x18] sm:$0xf]
        %v217 = vld [vmem:[#allocation5 + $0x1c] sm:$0xf]
        %v218 = vld [vmem:[#allocation5 + $0x20] sm:$0xf]
        %v219 = vld [vmem:[#allocation5 + $0x24] sm:$0xf]
        %v220 = vld [vmem:[#allocation5 + $0x28] sm:$0xf]
        %v221 = vld [vmem:[#allocation5 + $0x2c] sm:$0xf]
        %v222 = vld [vmem:[#allocation5 + $0x30] sm:$0xf]
        %v223 = vld [vmem:[#allocation5 + $0x34] sm:$0xf]
        %v224 = vld [vmem:[#allocation5 + $0x38] sm:$0xf]
        %v225 = vld [vmem:[#allocation5 + $0x3c] sm:$0xf]
        %v234 = vunpack.c.l.b16 %v202
        %v235 = vunpack.c.l.b16 %v203
        %v236 = vunpack.c.l.b16 %v204
        %v237 = vunpack.c.l.b16 %v205
        %v238 = vunpack.c.l.b16 %v206
        %v239 = vunpack.c.l.b16 %v207
        %v240 = vunpack.c.l.b16 %v208
        %v241 = vunpack.c.l.b16 %v209
        %v242 = vpack.c.b16 %v235, %v234
        %v243 = vpack.c.b16 %v237, %v236
        %v244 = vpack.c.b16 %v239, %v238
        %v245 = vpack.c.b16 %v241, %v240
        %v266 = vunpack.c.l.b16 %v210
        %v267 = vunpack.c.l.b16 %v211
        %v268 = vunpack.c.l.b16 %v212
        %v269 = vunpack.c.l.b16 %v213
        %v270 = vunpack.c.l.b16 %v214
        %v271 = vunpack.c.l.b16 %v215
        %v272 = vunpack.c.l.b16 %v216
        %v273 = vunpack.c.l.b16 %v217
        %v274 = vunpack.c.l.b16 %v218
        %v275 = vunpack.c.l.b16 %v219
        %v276 = vunpack.c.l.b16 %v220
        %v277 = vunpack.c.l.b16 %v221
        %v278 = vunpack.c.l.b16 %v222
        %v279 = vunpack.c.l.b16 %v223
        %v280 = vunpack.c.l.b16 %v224
        %v281 = vunpack.c.l.b16 %v225
        %v282 = vpack.c.b16 %v267, %v266
        %v283 = vpack.c.b16 %v269, %v268
        %v284 = vpack.c.b16 %v271, %v270
        %v285 = vpack.c.b16 %v273, %v272
        %v286 = vpack.c.b16 %v275, %v274
        %v287 = vpack.c.b16 %v277, %v276
        %v288 = vpack.c.b16 %v279, %v278
        %v289 = vpack.c.b16 %v281, %v280
        %298 = vmatpush.bf16.msra.mxu0 %v289
        %299 = vmatpush.bf16.msra.mxu0 %v288
        %300 = vmatpush.bf16.msra.mxu0 %v287
        %301 = vmatpush.bf16.msra.mxu0 %v286
        %302 = vmatpush.bf16.msra.mxu0 %v285
        %303 = vmatpush.bf16.msra.mxu0 %v284
        %304 = vmatpush.bf16.msra.mxu0 %v283
        %305 = vmatpush.bf16.msra.mxu0 %v282
        %306 = vmatmul.bf16.gmra.mxu0 %v242
        %v307 = vpop.f32.mrf.mxu0
        %v308 = vadd.f32 0.0, %v307
        %v309 = vpop.f32.mrf.mxu0
        %v310 = vadd.f32 0.0, %v309
        %311 = vmatmul.bf16.gmra.mxu0 %v243
        %v312 = vpop.f32.mrf.mxu0
        %v313 = vadd.f32 0.0, %v312
        %v314 = vpop.f32.mrf.mxu0
        %v315 = vadd.f32 0.0, %v314
        %316 = vmatmul.bf16.gmra.mxu0 %v244
        %v317 = vpop.f32.mrf.mxu0
        %v318 = vadd.f32 0.0, %v317
        %v319 = vpop.f32.mrf.mxu0
        %v320 = vadd.f32 0.0, %v319
        %321 = vmatmul.bf16.gmra.mxu0 %v245
        %v322 = vpop.f32.mrf.mxu0
        %v323 = vadd.f32 0.0, %v322
        %v324 = vpop.f32.mrf.mxu0
        %v325 = vadd.f32 0.0, %v324
        %326 = vdwg.mxu0
        %v327 = vld [vmem:[#allocation7] sm:$0x1]
        %v328 = vadd.f32 %v308, %v310
        %v329 = vadd.f32 %v328, %v313
        %v330 = vadd.f32 %v329, %v315
        %v331 = vadd.f32 %v330, %v318
        %v332 = vadd.f32 %v331, %v320
        %v333 = vadd.f32 %v332, %v323
        %v334 = vadd.f32 %v333, %v325
        %v335 = vrot.slane %v334, 4
        %v336 = vadd.f32 %v334, %v335
        %v337 = vrot.slane %v336, 2
        %v338 = vadd.f32 %v336, %v337
        %v339 = vrot.slane %v338, 1
        %v340 = vadd.f32 %v338, %v339
        %v341 = vadd.f32 %v327, %v340
        %342 = vst [vmem:[#allocation7] sm:$0x1] %v341
        %v343 = vld [vmem:[#allocation8] sm:$0x1]
        %v344 = vmul.f32 %v308, %v308
        %v345 = vmul.f32 %v310, %v310
        %v346 = vmul.f32 %v313, %v313
        %v347 = vmul.f32 %v315, %v315
        %v348 = vmul.f32 %v318, %v318
        %v349 = vmul.f32 %v320, %v320
        %v350 = vmul.f32 %v323, %v323
        %v351 = vmul.f32 %v325, %v325
        %v352 = vadd.f32 %v344, %v345
        %v353 = vadd.f32 %v352, %v346
        %v354 = vadd.f32 %v353, %v347
        %v355 = vadd.f32 %v354, %v348
        %v356 = vadd.f32 %v355, %v349
        %v357 = vadd.f32 %v356, %v350
        %v358 = vadd.f32 %v357, %v351
        %v359 = vrot.slane %v358, 4
        %v360 = vadd.f32 %v358, %v359
        %v361 = vrot.slane %v360, 2
        %v362 = vadd.f32 %v360, %v361
        %v363 = vrot.slane %v362, 1
        %v364 = vadd.f32 %v362, %v363
        %v365 = vadd.f32 %v343, %v364
        %366 = vst [vmem:[#allocation8] sm:$0x1] %v365
        // Predicated region
        $region41: #{tpu_custom_call.1} parent=27 // pred_check
          %p367 = pneg %p81
        $region42: #{tpu_custom_call.1} parent=27 // pred_check_branch
          %369 = sbr.rel (%p367) target = $region44
        $region43: #{tpu_custom_call.1} parent=27 // pred_region
          %371 = vsyncadd [#allocation4], 0
          %s373 = sshll.u32 [#allocation7], 4
          %s374 = int_to_ptr.vmem [resolvable:$true] %s373
          %s375 = sshll.u32 %s2, 4
          %s376 = int_to_ptr.hbm [resolvable:$true] %s375
          %378 = dma.vmem_to_hbm [thread:$0]  %s374, 16, %s376, [#allocation4]
        $region44: #{tpu_custom_call.1} parent=27 // pred_fallthru
          _
        // Predicated region
        $region45: #{tpu_custom_call.1} parent=27 // pred_check
          %p379 = pneg %p102
        $region46: #{tpu_custom_call.1} parent=27 // pred_check_branch
          %381 = sbr.rel (%p379) target = $region48
        $region47: #{tpu_custom_call.1} parent=27 // pred_region
          %383 = vsyncadd [#allocation9], 0
          %s385 = sshll.u32 [#allocation8], 4
          %s386 = int_to_ptr.vmem [resolvable:$true] %s385
          %s387 = sshll.u32 %s3, 4
          %s388 = int_to_ptr.hbm [resolvable:$true] %s387
          %390 = dma.vmem_to_hbm [thread:$0]  %s386, 16, %s388, [#allocation9]
        $region48: #{tpu_custom_call.1} parent=27 // pred_fallthru
          _
        // Predicated region
        $region49: #{tpu_custom_call.1} parent=27 // pred_check
          %p391 = pneg %p81
        $region50: #{tpu_custom_call.1} parent=27 // pred_check_branch
          %393 = sbr.rel (%p391) target = $region52
        $region51: #{tpu_custom_call.1} parent=27 // pred_region
          %395 = dma.done [#allocation4], 16
        $region52: #{tpu_custom_call.1} parent=27 // pred_fallthru
          _
        // Predicated region
        $region53: #{tpu_custom_call.1} parent=27 // pred_check
          %p396 = pneg %p102
        $region54: #{tpu_custom_call.1} parent=27 // pred_check_branch
          %398 = sbr.rel (%p396) target = $region56
        $region55: #{tpu_custom_call.1} parent=27 // pred_region
          %400 = dma.done [#allocation9], 16
        $region56: #{tpu_custom_call.1} parent=27 // pred_fallthru
          _
      $region28: #{tpu_custom_call.1} parent=5 // pred_fallthru
        _
      %p401 = scmp.le.s32.totalorder 2, %s16
      // Predicated region
      $region57: #{tpu_custom_call.1} parent=5 // pred_check
        %p402 = pneg %p401
      $region58: #{tpu_custom_call.1} parent=5 // pred_check_branch
        %404 = sbr.rel (%p402) target = $region60
      $region59: #{tpu_custom_call.1} parent=5 // pred_region
        %s405 = ssub.s32 %s16, 2
      $region60: #{tpu_custom_call.1} parent=5 // pred_fallthru
        _
    $region6: #{tpu_custom_call.1} parent=1 // loop_footer
      %s20 = sadd.s32 1, %s16
    $region7: #{tpu_custom_call.1} parent=1 // loop_footer_branch
      %15 = sbr.rel target = $region3
    $region8: #{tpu_custom_call.1} parent=1 // loop_exit
      _
    %406 = vsyncpa [#allocation3], 1
    %s407 = scalar_lea.sflag [#allocation3], 1
    %408 = vsyncpa %s407, 1
    %409 = vsyncpa [#allocation6], 1
    %410 = vsyncpa [#allocation4], 1
    %s411 = scalar_lea.sflag [#allocation4], 1
    %412 = vsyncpa %s411, 1
    %413 = vsyncpa [#allocation9], 1

</llo_original>
